<compile_context>
chip_gen: v7x
topology: tpu7x:2x2x1
jax: 0.10.0
libtpu: 0.0.40
codegen_flags: <defaults>
</compile_context>

<pallas_src>
import math
import functools

import jax
import jax.numpy as jnp
from jax.experimental import pallas as pl
from jax.experimental.pallas import tpu as pltpu


_LANE = 128
_TN_CAP = 512             # max target-dim tile (keeps double-buffering alive on v7x)
_VMEM_BUDGET = 24 << 20   # conservative double-buffered budget for all TPU gens
_MAX_LAYERS_PER_STEP = 8


def _round_up(x, m):
    return (x + m - 1) // m * m


def _pick_tn(tp):
    """Largest divisor of tp that is a multiple of 128 and <= _TN_CAP."""
    if tp <= _TN_CAP:
        return tp
    best = _LANE
    t = _LANE
    while t <= _TN_CAP:
        if tp % t == 0:
            best = t
        t += _LANE
    return best


def _pick_lb(n_layers, batch, src, tn, act_bytes, par_bytes):
    """Largest divisor of n_layers (<= cap) whose double-buffered blocks fit VMEM."""
    best = 1
    for cand in range(1, min(n_layers, _MAX_LAYERS_PER_STEP) + 1):
        if n_layers % cand:
            continue
        per_step = cand * (2 * batch * src * act_bytes            # x block
                           + (2 * src + 1) * tn * par_bytes       # packed W+b block
                           + batch * tn * act_bytes)              # out block
        if 2 * per_step <= _VMEM_BUDGET:                          # x2: double buffering
            best = cand
    return best


def _converter_kernel(x_ref, wb_ref, o_ref, *, s, lb):
    # x_ref : (lb, 2, B, S)    activations (f32)
    # wb_ref: (lb, 2S+1, tn)   packed [W_fwd ; W_bwd ; bias] (param dtype, e.g. bf16)
    # o_ref : (lb, B, tn)      output (f32), tn is a multiple of 128 -> lane-dense stores
    dt = wb_ref.dtype
    for l in range(lb):  # static unroll; every index / slice below is static
        x_fwd = x_ref[l, 0].astype(dt)                  # (B, S)
        x_bwd = x_ref[l, 1].astype(dt)                  # (B, S)
        w_fwd = wb_ref[l, pl.ds(0, s), :]               # (S, tn)
        w_bwd = wb_ref[l, pl.ds(s, s), :]               # (S, tn)
        bias = wb_ref[l, pl.ds(2 * s, 1), :]            # (1, tn)
        acc = jnp.dot(x_fwd, w_fwd, preferred_element_type=jnp.float32)
        acc = acc + jnp.dot(x_bwd, w_bwd, preferred_element_type=jnp.float32)
        # Epilogue (bias add + tanh) kept in f32 (EUP tanh, no bf16 VPU needed).
        o_ref[l] = jnp.tanh(acc + bias.astype(jnp.float32)).astype(o_ref.dtype)


def _convert_pallas(sh, packed_wb, target_hidden_size):
    """sh: (L*2, B, S) -> (L, B, T) = tanh(concat-pair(sh) @ W + b)."""
    l2, batch, src = sh.shape
    n_layers = l2 // 2
    tp = packed_wb.shape[-1]

    # Free reshape (no data movement): layer l's fwd/bwd rows become x[l, 0/1].
    x = sh.reshape(n_layers, 2, batch, src)

    tn = _pick_tn(tp)
    lb = _pick_lb(n_layers, batch, src, tn,
                  sh.dtype.itemsize, packed_wb.dtype.itemsize)

    out = pl.pallas_call(
        functools.partial(_converter_kernel, s=src, lb=lb),
        out_shape=jax.ShapeDtypeStruct((n_layers, batch, tp), sh.dtype),
        grid_spec=pltpu.PrefetchScalarGridSpec(
            num_scalar_prefetch=0,
            # T-tiles are the inner (fastest) axis -> x block index is constant
            # over it and stays resident in VMEM (no re-DMA).
            grid=(n_layers // lb, tp // tn),
            in_specs=[
                pl.BlockSpec((lb, 2, batch, src), lambda i, j: (i, 0, 0, 0)),
                pl.BlockSpec((lb, 2 * src + 1, tn), lambda i, j: (i, 0, j)),
            ],
            out_specs=pl.BlockSpec((lb, batch, tn), lambda i, j: (i, 0, j)),
        ),
        compiler_params=pltpu.CompilerParams(
            dimension_semantics=("parallel", "parallel")),
    )(x, packed_wb)

    if tp != target_hidden_size:
        out = out[..., :target_hidden_size]
    return out


class ConverterPallas:
    """JAX/Pallas port of the PyTorch Converter module."""

    def __init__(self, is_lstm, layer_number, source_hidden_size,
                 target_hidden_size, key, param_dtype=jnp.bfloat16):
        self.is_lstm = is_lstm
        self.target_hidden_size = target_hidden_size
        stdv = 1.0 / math.sqrt(2 * source_hidden_size)
        kw, kb = jax.random.split(key)
        # f32 master copies (match the PyTorch parameterization / used as reference).
        self.weight = jax.random.uniform(
            kw, (layer_number, 2 * source_hidden_size, target_hidden_size),
            minval=-stdv, maxval=stdv, dtype=jnp.float32)
        self.bias = jax.random.uniform(
            kb, (layer_number, 1, target_hidden_size),
            minval=-stdv, maxval=stdv, dtype=jnp.float32)

        # Kernel-side packed parameter: [W ; bias] along the contraction axis,
        # target dim zero-padded to a lane multiple (lane-dense stores), cast to
        # param_dtype (bf16 default -> half the HBM weight traffic).
        tp = _round_up(target_hidden_size, _LANE)
        pad = tp - target_hidden_size
        w_p = jnp.pad(self.weight, ((0, 0), (0, 0), (0, pad)))
        b_p = jnp.pad(self.bias, ((0, 0), (0, 0), (0, pad)))
        self.packed_wb = jnp.concatenate([w_p, b_p], axis=1).astype(param_dtype)

    def __call__(self, source_hidden):
        if self.is_lstm:
            sh, _ = source_hidden
            th = _convert_pallas(sh, self.packed_wb, self.target_hidden_size)
            tc = jnp.zeros_like(th)
            return (th, tc)
        return _convert_pallas(source_hidden, self.packed_wb,
                               self.target_hidden_size)


def _convert_ref(sh, weight, bias):
    """Pure-JAX f32 reference of Converter._convert."""
    l2, batch, src = sh.shape
    n_layers = l2 // 2
    sh_t = sh.reshape(n_layers, 2, batch, src).transpose(0, 2, 1, 3)
    sh_t = sh_t.reshape(n_layers, batch, 2 * src)
    return jnp.tanh(jnp.einsum("lbk,lkt->lbt", sh_t, weight) + bias)


if __name__ == "__main__":
    key = jax.random.PRNGKey(0)
    k_param, k_h, k_c = jax.random.split(key, 3)

    layer_number = 2
    source_hidden_size = 32
    target_hidden_size = 32
    batch_size = 8

    h = jax.random.normal(
        k_h, (layer_number * 2, batch_size, source_hidden_size), jnp.float32)
    c = jax.random.normal(
        k_c, (layer_number * 2, batch_size, source_hidden_size), jnp.float32)

    # Default (bf16 params) LSTM path.
    conv = ConverterPallas(
        is_lstm=True,
        layer_number=layer_number,
        source_hidden_size=source_hidden_size,
        target_hidden_size=target_hidden_size,
        key=k_param,
    )
    th, tc = conv((h, c))
    th = jax.block_until_ready(th)
    tc = jax.block_until_ready(tc)

    th_ref = _convert_ref(h, conv.weight, conv.bias)
    assert th.shape == (layer_number, batch_size, target_hidden_size)
    assert tc.shape == th.shape
    # bf16 weights -> slightly looser tolerance vs. the f32 reference.
    assert jnp.allclose(th, th_ref, atol=2e-2, rtol=2e-2)
    assert jnp.all(tc == 0)

    # Exact f32 parameter path + non-LSTM branch.
    conv32 = ConverterPallas(False, layer_number, source_hidden_size,
                             target_hidden_size, k_param,
                             param_dtype=jnp.float32)
    th2 = jax.block_until_ready(conv32(h))
    assert th2.shape == (layer_number, batch_size, target_hidden_size)
    assert jnp.allclose(th2, _convert_ref(h, conv32.weight, conv32.bias),
                        atol=1e-5, rtol=1e-5)

    # TODO(synk): the activation contraction dim S is left unpadded (padding it
    # to 128 lanes would reintroduce an extra HBM pass over the activations).

    print("KERNEL_OK")
</pallas_src>

<mosaic_0001>
module attributes {stable_mosaic.version = 11 : i64} {
  func.func @_converter_kernel(%arg0: i32, %arg1: i32, %arg2: memref<2x2x8x32xf32, #tpu.memory_space<vmem>>, %arg3: memref<2x65x128xbf16, #tpu.memory_space<vmem>>, %arg4: memref<2x8x128xf32, #tpu.memory_space<vmem>>) attributes {dimension_semantics = [#tpu.dimension_semantics<parallel>, #tpu.dimension_semantics<parallel>], iteration_bounds = array<i64: 1, 1>, scalar_prefetch = 0 : i64, scratch_operands = 0 : i64, tpu.core_type = #tpu.core_type<tc>, window_params = [{transform_indices = @transform_0, window_bounds = array<i64: 2, 2, 8, 32>}, {transform_indices = @transform_1, window_bounds = array<i64: 2, 65, 128>}, {transform_indices = @transform_2, window_bounds = array<i64: 2, 8, 128>}]} {
    %c0 = arith.constant 0 : index
    %c0_0 = arith.constant 0 : index
    %c0_1 = arith.constant 0 : index
    %c0_2 = arith.constant 0 : index
    %0 = vector.load %arg2[%c0, %c0_0, %c0_1, %c0_2] : memref<2x2x8x32xf32, #tpu.memory_space<vmem>>, vector<1x1x8x32xf32>
    %1 = vector.shape_cast %0 : vector<1x1x8x32xf32> to vector<8x32xf32>
    %2 = arith.truncf %1 : vector<8x32xf32> to vector<8x32xbf16>
    %c0_3 = arith.constant 0 : index
    %c1 = arith.constant 1 : index
    %c0_4 = arith.constant 0 : index
    %c0_5 = arith.constant 0 : index
    %3 = vector.load %arg2[%c0_3, %c1, %c0_4, %c0_5] : memref<2x2x8x32xf32, #tpu.memory_space<vmem>>, vector<1x1x8x32xf32>
    %4 = vector.shape_cast %3 : vector<1x1x8x32xf32> to vector<8x32xf32>
    %5 = arith.truncf %4 : vector<8x32xf32> to vector<8x32xbf16>
    %c0_6 = arith.constant 0 : index
    %c0_7 = arith.constant 0 : index
    %c0_8 = arith.constant 0 : index
    %6 = vector.load %arg3[%c0_6, %c0_7, %c0_8] : memref<2x65x128xbf16, #tpu.memory_space<vmem>>, vector<1x32x128xbf16>
    %7 = vector.shape_cast %6 : vector<1x32x128xbf16> to vector<32x128xbf16>
    %c0_9 = arith.constant 0 : index
    %c32 = arith.constant 32 : index
    %c0_10 = arith.constant 0 : index
    %8 = vector.load %arg3[%c0_9, %c32, %c0_10] : memref<2x65x128xbf16, #tpu.memory_space<vmem>>, vector<1x32x128xbf16>
    %9 = vector.shape_cast %8 : vector<1x32x128xbf16> to vector<32x128xbf16>
    %c0_11 = arith.constant 0 : index
    %c64 = arith.constant 64 : index
    %c0_12 = arith.constant 0 : index
    %10 = vector.load %arg3[%c0_11, %c64, %c0_12] : memref<2x65x128xbf16, #tpu.memory_space<vmem>>, vector<1x1x128xbf16>
    %11 = vector.shape_cast %10 : vector<1x1x128xbf16> to vector<1x128xbf16>
    %cst = arith.constant dense<0.000000e+00> : vector<8x128xf32>
    %12 = tpu.matmul %2, %7, %cst {dimension_numbers = #tpu.dot_dimension_numbers<[1], [0], [0], [1], [0, 0, 1, 1], [], []>} : vector<8x32xbf16>, vector<32x128xbf16>, vector<8x128xf32> -> vector<8x128xf32>
    %cst_13 = arith.constant dense<0.000000e+00> : vector<8x128xf32>
    %13 = tpu.matmul %5, %9, %cst_13 {dimension_numbers = #tpu.dot_dimension_numbers<[1], [0], [0], [1], [0, 0, 1, 1], [], []>} : vector<8x32xbf16>, vector<32x128xbf16>, vector<8x128xf32> -> vector<8x128xf32>
    %14 = arith.addf %12, %13 : vector<8x128xf32>
    %15 = arith.extf %11 : vector<1x128xbf16> to vector<1x128xf32>
    %16 = vector.broadcast %15 : vector<1x128xf32> to vector<8x128xf32>
    %17 = arith.addf %14, %16 : vector<8x128xf32>
    %18 = math.tanh %17 : vector<8x128xf32>
    %c0_14 = arith.constant 0 : index
    %c0_15 = arith.constant 0 : index
    %c0_16 = arith.constant 0 : index
    %19 = vector.load %arg4[%c0_14, %c0_15, %c0_16] : memref<2x8x128xf32, #tpu.memory_space<vmem>>, vector<1x8x128xf32>
    %20 = vector.shape_cast %19 : vector<1x8x128xf32> to vector<8x128xf32>
    %21 = vector.shape_cast %18 : vector<8x128xf32> to vector<1x8x128xf32>
    tpu.vector_store %arg4[%c0_14, %c0_15, %c0_16], %21 {strides = array<i32>} : memref<2x8x128xf32, #tpu.memory_space<vmem>>, vector<1x8x128xf32>,
    %c1_17 = arith.constant 1 : index
    %c0_18 = arith.constant 0 : index
    %c0_19 = arith.constant 0 : index
    %c0_20 = arith.constant 0 : index
    %22 = vector.load %arg2[%c1_17, %c0_18, %c0_19, %c0_20] : memref<2x2x8x32xf32, #tpu.memory_space<vmem>>, vector<1x1x8x32xf32>
    %23 = vector.shape_cast %22 : vector<1x1x8x32xf32> to vector<8x32xf32>
    %24 = arith.truncf %23 : vector<8x32xf32> to vector<8x32xbf16>
    %c1_21 = arith.constant 1 : index
    %c1_22 = arith.constant 1 : index
    %c0_23 = arith.constant 0 : index
    %c0_24 = arith.constant 0 : index
    %25 = vector.load %arg2[%c1_21, %c1_22, %c0_23, %c0_24] : memref<2x2x8x32xf32, #tpu.memory_space<vmem>>, vector<1x1x8x32xf32>
    %26 = vector.shape_cast %25 : vector<1x1x8x32xf32> to vector<8x32xf32>
    %27 = arith.truncf %26 : vector<8x32xf32> to vector<8x32xbf16>
    %c1_25 = arith.constant 1 : index
    %c0_26 = arith.constant 0 : index
    %c0_27 = arith.constant 0 : index
    %28 = vector.load %arg3[%c1_25, %c0_26, %c0_27] : memref<2x65x128xbf16, #tpu.memory_space<vmem>>, vector<1x32x128xbf16>
    %29 = vector.shape_cast %28 : vector<1x32x128xbf16> to vector<32x128xbf16>
    %c1_28 = arith.constant 1 : index
    %c32_29 = arith.constant 32 : index
    %c0_30 = arith.constant 0 : index
    %30 = vector.load %arg3[%c1_28, %c32_29, %c0_30] : memref<2x65x128xbf16, #tpu.memory_space<vmem>>, vector<1x32x128xbf16>
    %31 = vector.shape_cast %30 : vector<1x32x128xbf16> to vector<32x128xbf16>
    %c1_31 = arith.constant 1 : index
    %c64_32 = arith.constant 64 : index
    %c0_33 = arith.constant 0 : index
    %32 = vector.load %arg3[%c1_31, %c64_32, %c0_33] : memref<2x65x128xbf16, #tpu.memory_space<vmem>>, vector<1x1x128xbf16>
    %33 = vector.shape_cast %32 : vector<1x1x128xbf16> to vector<1x128xbf16>
    %cst_34 = arith.constant dense<0.000000e+00> : vector<8x128xf32>
    %34 = tpu.matmul %24, %29, %cst_34 {dimension_numbers = #tpu.dot_dimension_numbers<[1], [0], [0], [1], [0, 0, 1, 1], [], []>} : vector<8x32xbf16>, vector<32x128xbf16>, vector<8x128xf32> -> vector<8x128xf32>
    %cst_35 = arith.constant dense<0.000000e+00> : vector<8x128xf32>
    %35 = tpu.matmul %27, %31, %cst_35 {dimension_numbers = #tpu.dot_dimension_numbers<[1], [0], [0], [1], [0, 0, 1, 1], [], []>} : vector<8x32xbf16>, vector<32x128xbf16>, vector<8x128xf32> -> vector<8x128xf32>
    %36 = arith.addf %34, %35 : vector<8x128xf32>
    %37 = arith.extf %33 : vector<1x128xbf16> to vector<1x128xf32>
    %38 = vector.broadcast %37 : vector<1x128xf32> to vector<8x128xf32>
    %39 = arith.addf %36, %38 : vector<8x128xf32>
    %40 = math.tanh %39 : vector<8x128xf32>
    %c1_36 = arith.constant 1 : index
    %c0_37 = arith.constant 0 : index
    %c0_38 = arith.constant 0 : index
    %41 = vector.load %arg4[%c1_36, %c0_37, %c0_38] : memref<2x8x128xf32, #tpu.memory_space<vmem>>, vector<1x8x128xf32>
    %42 = vector.shape_cast %41 : vector<1x8x128xf32> to vector<8x128xf32>
    %43 = vector.shape_cast %40 : vector<8x128xf32> to vector<1x8x128xf32>
    tpu.vector_store %arg4[%c1_36, %c0_37, %c0_38], %43 {strides = array<i32>} : memref<2x8x128xf32, #tpu.memory_space<vmem>>, vector<1x8x128xf32>,
    return
  }
  func.func @transform_0(%arg0: i32, %arg1: i32) -> (i32, i32, i32, i32) {
    %c0_i32 = arith.constant 0 : i32
    %c0_i32_0 = arith.constant 0 : i32
    %c0_i32_1 = arith.constant 0 : i32
    %c0_i32_2 = arith.constant 0 : i32
    return %arg0, %c0_i32, %c0_i32_0, %c0_i32_1 : i32, i32, i32, i32
  }
  func.func @transform_1(%arg0: i32, %arg1: i32) -> (i32, i32, i32) {
    %c0_i32 = arith.constant 0 : i32
    %c0_i32_0 = arith.constant 0 : i32
    return %arg0, %c0_i32, %arg1 : i32, i32, i32
  }
  func.func @transform_2(%arg0: i32, %arg1: i32) -> (i32, i32, i32) {
    %c0_i32 = arith.constant 0 : i32
    %c0_i32_0 = arith.constant 0 : i32
    return %arg0, %c0_i32, %arg1 : i32, i32, i32
  }
}

</mosaic_0001>

<llo_original>
// kernel: tpu_custom_call.1
$region0: #{tpu_custom_call.1}
  #allocation0 [shape = 'u32[]', space=smem, size = 0x4, offset = 0x4, fixed_abs, tag = 'smem constant byte address 0x4 - core index']
  #allocation1 [shape = 'u32[144,128]{1,0:T(1,128)}', space=vmem, size = 0x12000, scoped, tag = 'internal scratch']
  %s0 = inlined_call_operand.vmem [shape: f32[2,2,8,32], index: 0, kind: input, shape index: {}]
  %s1 = inlined_call_operand.vmem [shape: bf16[2,65,128], index: 1, kind: input, shape index: {}]
  %s2 = inlined_call_operand.hbm [shape: f32[2,8,128], index: 2, kind: output, shape index: {}]
  %s3 = sld [smem:[#allocation0]]
  $region18: #{tpu_custom_call.1} parent=0
    _
  %s5 = ssub.s32 1, %s3
  %s6 = scalar_select 0, %s5, %s3
  $region1: #{tpu_custom_call.1} parent=0
    #allocation2 [shape = 'u8[8192]{0}', space=vmem, size = 0x2000, scoped, tag = 'output window, operand 0, single buffered']
    #allocation3 [shape = 's32[1]{0}', space=sflag, size = 0x4, scoped, tag = 'scoped memory for tpu_custom_call.1']
    %7 = vsyncpa [#allocation3], 0
    // Predicated region
    $region2: #{tpu_custom_call.1} parent=1 // pred_check
      _
    $region3: #{tpu_custom_call.1} parent=1 // pred_check_branch
      %9 = sbr.rel (0) target = $region5
    $region4: #{tpu_custom_call.1} parent=1 // pred_region
      _
    $region5: #{tpu_custom_call.1} parent=1 // pred_fallthru
      _
    // Predicated region
    $region6: #{tpu_custom_call.1} parent=1 // pred_check
      _
    $region7: #{tpu_custom_call.1} parent=1 // pred_check_branch
      %11 = sbr.rel (0) target = $region9
    $region8: #{tpu_custom_call.1} parent=1 // pred_region
      _
    $region9: #{tpu_custom_call.1} parent=1 // pred_fallthru
      _
    %v13 = vld [vmem:[%s0] sm:$0xff]
    %v14 = vpack.c.bf16 %v13, %v13
    %s15 = scalar_lea.vmem %s0, 8
    %v16 = vld [vmem:[%s15] sm:$0xff]
    %v17 = vpack.c.bf16 %v16, %v16
    %v18 = vld [vmem:[%s1] sm:$0xf]
    %v19 = vld [vmem:[%s1 + $0x4] sm:$0xf]
    %v20 = vld [vmem:[%s1 + $0x8] sm:$0xf]
    %v21 = vld [vmem:[%s1 + $0xc] sm:$0xf]
    %v22 = vld [vmem:[%s1 + $0x10] sm:$0xf]
    %v23 = vld [vmem:[%s1 + $0x14] sm:$0xf]
    %v24 = vld [vmem:[%s1 + $0x18] sm:$0xf]
    %v25 = vld [vmem:[%s1 + $0x1c] sm:$0xf]
    %v26 = vld [vmem:[%s1 + $0x20] sm:$0x1]
    %v31 = vunpack.c.l.b16 %v22
    %v32 = vunpack.c.l.b16 %v23
    %v33 = vunpack.c.l.b16 %v24
    %v34 = vunpack.c.l.b16 %v25
    %v35 = vpack.c.b16 %v32, %v31
    %v36 = vpack.c.b16 %v34, %v33
    %vm39 = vcmask 261120
    %v41 = vsel %vm39, %v17, 0
    %43 = vmatprep.subr.bf16.mxu0 0
    %44 = vmatpush1.bf16.msra.mxu0 %v35
    %45 = vmatprep.subr.bf16.mxu0 0
    %46 = vmatpush1.bf16.msra.mxu0 %v36
    %47 = vmatprep.subr.bf16.mxu0 0
    %48 = vmatpush1.bf16.msra.mxu0 0
    %49 = vmatprep.subr.bf16.mxu0 0
    %50 = vmatpush1.bf16.msra.mxu0 0
    %51 = vmatprep.subr.bf16.mxu0 0
    %52 = vmatpush1.bf16.msra.mxu0 0
    %53 = vmatprep.subr.bf16.mxu0 0
    %54 = vmatpush1.bf16.msra.mxu0 0
    %55 = vmatprep.subr.bf16.mxu0 0
    %56 = vmatpush1.bf16.msra.mxu0 0
    %57 = vmatprep.subr.bf16.mxu0 0
    %58 = vmatpush1.bf16.msra.mxu0 0
    %59 = vmatprep.subr.bf16.mxu0 0
    %60 = vmatpush1.bf16.msra.mxu0 0
    %61 = vmatprep.subr.bf16.mxu0 0
    %62 = vmatpush1.bf16.msra.mxu0 0
    %63 = vmatprep.subr.bf16.mxu0 0
    %64 = vmatpush1.bf16.msra.mxu0 0
    %65 = vmatprep.subr.bf16.mxu0 0
    %66 = vmatpush1.bf16.msra.mxu0 0
    %67 = vmatprep.subr.bf16.mxu0 0
    %68 = vmatpush1.bf16.msra.mxu0 0
    %69 = vmatprep.subr.bf16.mxu0 0
    %70 = vmatpush1.bf16.msra.mxu0 0
    %71 = vmatprep.subr.bf16.mxu0 0
    %72 = vmatpush1.bf16.msra.mxu0 0
    %73 = vmatprep.subr.bf16.mxu0 0
    %74 = vmatpush1.bf16.msra.mxu0 0
    %75 = vmatprep.mubr.bf16.mxu0 0
    %76 = vmatmul.mubr.bf16.gmra.mrb[0].mxu0 %v41
    %v77 = vpop.f32.mrb[0].mxu0
    %v78 = vadd.f32 0.0, %v77
    %v79 = vpop.f32.mrb[0].mxu0
    %v80 = vpop.f32.mrb[0].mxu0
    %v81 = vpop.f32.mrb[0].mxu0
    %82 = vdwg.mxu0
    %v87 = vunpack.c.l.b16 %v18
    %v88 = vunpack.c.l.b16 %v19
    %v89 = vunpack.c.l.b16 %v20
    %v90 = vunpack.c.l.b16 %v21
    %v91 = vpack.c.b16 %v88, %v87
    %v92 = vpack.c.b16 %v90, %v89
    %v96 = vsel %vm39, %v14, 0
    %98 = vmatprep.subr.bf16.mxu0 0
    %99 = vmatpush1.bf16.msra.mxu0 %v91
    %100 = vmatprep.subr.bf16.mxu0 0
    %101 = vmatpush1.bf16.msra.mxu0 %v92
    %102 = vmatprep.subr.bf16.mxu0 0
    %103 = vmatpush1.bf16.msra.mxu0 0
    %104 = vmatprep.subr.bf16.mxu0 0
    %105 = vmatpush1.bf16.msra.mxu0 0
    %106 = vmatprep.subr.bf16.mxu0 0
    %107 = vmatpush1.bf16.msra.mxu0 0
    %108 = vmatprep.subr.bf16.mxu0 0
    %109 = vmatpush1.bf16.msra.mxu0 0
    %110 = vmatprep.subr.bf16.mxu0 0
    %111 = vmatpush1.bf16.msra.mxu0 0
    %112 = vmatprep.subr.bf16.mxu0 0
    %113 = vmatpush1.bf16.msra.mxu0 0
    %114 = vmatprep.subr.bf16.mxu0 0
    %115 = vmatpush1.bf16.msra.mxu0 0
    %116 = vmatprep.subr.bf16.mxu0 0
    %117 = vmatpush1.bf16.msra.mxu0 0
    %118 = vmatprep.subr.bf16.mxu0 0
    %119 = vmatpush1.bf16.msra.mxu0 0
    %120 = vmatprep.subr.bf16.mxu0 0
    %121 = vmatpush1.bf16.msra.mxu0 0
    %122 = vmatprep.subr.bf16.mxu0 0
    %123 = vmatpush1.bf16.msra.mxu0 0
    %124 = vmatprep.subr.bf16.mxu0 0
    %125 = vmatpush1.bf16.msra.mxu0 0
    %126 = vmatprep.subr.bf16.mxu0 0
    %127 = vmatpush1.bf16.msra.mxu0 0
    %128 = vmatprep.subr.bf16.mxu0 0
    %129 = vmatpush1.bf16.msra.mxu0 0
    %130 = vmatprep.mubr.bf16.mxu0 0
    %131 = vmatmul.mubr.bf16.gmra.mrb[0].mxu0 %v96
    %v132 = vpop.f32.mrb[0].mxu0
    %v133 = vadd.f32 %v78, %v132
    %v134 = vpop.f32.mrb[0].mxu0
    %v135 = vpop.f32.mrb[0].mxu0
    %v136 = vpop.f32.mrb[0].mxu0
    %137 = vdwg.mxu0
    %v138 = vunpack.c.l.bf16 %v26
    %v139 = vlaneseq
    %v140 = vshrl.u32 %v139, 7
    %v141 = vsub.s32 0, %v140
    %v142 = vrot.slane %v138, %v141
    %v143 = vadd.f32 %v133, %v142
    %v144 = vtanh.pop %v143
    %145 = vst [vmem:[#allocation2] sm:$0xff] %v144
    %s146 = scalar_lea.vmem %s0, 16
    %v147 = vld [vmem:[%s146] sm:$0xff]
    %v148 = vpack.c.bf16 %v147, %v147
    %s149 = scalar_lea.vmem %s0, 24
    %v150 = vld [vmem:[%s149] sm:$0xff]
    %v151 = vpack.c.bf16 %v150, %v150
    %s152 = scalar_lea.vmem %s1, 36
    %v153 = vld [vmem:[%s152] sm:$0xf]
    %v154 = vld [vmem:[%s152 + $0x4] sm:$0xf]
    %v155 = vld [vmem:[%s152 + $0x8] sm:$0xf]
    %v156 = vld [vmem:[%s152 + $0xc] sm:$0xf]
    %v157 = vld [vmem:[%s152 + $0x10] sm:$0xf]
    %v158 = vld [vmem:[%s152 + $0x14] sm:$0xf]
    %v159 = vld [vmem:[%s152 + $0x18] sm:$0xf]
    %v160 = vld [vmem:[%s152 + $0x1c] sm:$0xf]
    %v161 = vld [vmem:[%s152 + $0x20] sm:$0x1]
    %v166 = vunpack.c.l.b16 %v157
    %v167 = vunpack.c.l.b16 %v158
    %v168 = vunpack.c.l.b16 %v159
    %v169 = vunpack.c.l.b16 %v160
    %v170 = vpack.c.b16 %v167, %v166
    %v171 = vpack.c.b16 %v169, %v168
    %v175 = vsel %vm39, %v151, 0
    %177 = vmatprep.subr.bf16.mxu0 0
    %178 = vmatpush1.bf16.msra.mxu0 %v170
    %179 = vmatprep.subr.bf16.mxu0 0
    %180 = vmatpush1.bf16.msra.mxu0 %v171
    %181 = vmatprep.subr.bf16.mxu0 0
    %182 = vmatpush1.bf16.msra.mxu0 0
    %183 = vmatprep.subr.bf16.mxu0 0
    %184 = vmatpush1.bf16.msra.mxu0 0
    %185 = vmatprep.subr.bf16.mxu0 0
    %186 = vmatpush1.bf16.msra.mxu0 0
    %187 = vmatprep.subr.bf16.mxu0 0
    %188 = vmatpush1.bf16.msra.mxu0 0
    %189 = vmatprep.subr.bf16.mxu0 0
    %190 = vmatpush1.bf16.msra.mxu0 0
    %191 = vmatprep.subr.bf16.mxu0 0
    %192 = vmatpush1.bf16.msra.mxu0 0
    %193 = vmatprep.subr.bf16.mxu0 0
    %194 = vmatpush1.bf16.msra.mxu0 0
    %195 = vmatprep.subr.bf16.mxu0 0
    %196 = vmatpush1.bf16.msra.mxu0 0
    %197 = vmatprep.subr.bf16.mxu0 0
    %198 = vmatpush1.bf16.msra.mxu0 0
    %199 = vmatprep.subr.bf16.mxu0 0
    %200 = vmatpush1.bf16.msra.mxu0 0
    %201 = vmatprep.subr.bf16.mxu0 0
    %202 = vmatpush1.bf16.msra.mxu0 0
    %203 = vmatprep.subr.bf16.mxu0 0
    %204 = vmatpush1.bf16.msra.mxu0 0
    %205 = vmatprep.subr.bf16.mxu0 0
    %206 = vmatpush1.bf16.msra.mxu0 0
    %207 = vmatprep.subr.bf16.mxu0 0
    %208 = vmatpush1.bf16.msra.mxu0 0
    %209 = vmatprep.mubr.bf16.mxu0 0
    %210 = vmatmul.mubr.bf16.gmra.mrb[0].mxu0 %v175
    %v211 = vpop.f32.mrb[0].mxu0
    %v212 = vadd.f32 0.0, %v211
    %v213 = vpop.f32.mrb[0].mxu0
    %v214 = vpop.f32.mrb[0].mxu0
    %v215 = vpop.f32.mrb[0].mxu0
    %216 = vdwg.mxu0
    %v221 = vunpack.c.l.b16 %v153
    %v222 = vunpack.c.l.b16 %v154
    %v223 = vunpack.c.l.b16 %v155
    %v224 = vunpack.c.l.b16 %v156
    %v225 = vpack.c.b16 %v222, %v221
    %v226 = vpack.c.b16 %v224, %v223
    %v230 = vsel %vm39, %v148, 0
    %232 = vmatprep.subr.bf16.mxu0 0
    %233 = vmatpush1.bf16.msra.mxu0 %v225
    %234 = vmatprep.subr.bf16.mxu0 0
    %235 = vmatpush1.bf16.msra.mxu0 %v226
    %236 = vmatprep.subr.bf16.mxu0 0
    %237 = vmatpush1.bf16.msra.mxu0 0
    %238 = vmatprep.subr.bf16.mxu0 0
    %239 = vmatpush1.bf16.msra.mxu0 0
    %240 = vmatprep.subr.bf16.mxu0 0
    %241 = vmatpush1.bf16.msra.mxu0 0
    %242 = vmatprep.subr.bf16.mxu0 0
    %243 = vmatpush1.bf16.msra.mxu0 0
    %244 = vmatprep.subr.bf16.mxu0 0
    %245 = vmatpush1.bf16.msra.mxu0 0
    %246 = vmatprep.subr.bf16.mxu0 0
    %247 = vmatpush1.bf16.msra.mxu0 0
    %248 = vmatprep.subr.bf16.mxu0 0
    %249 = vmatpush1.bf16.msra.mxu0 0
    %250 = vmatprep.subr.bf16.mxu0 0
    %251 = vmatpush1.bf16.msra.mxu0 0
    %252 = vmatprep.subr.bf16.mxu0 0
    %253 = vmatpush1.bf16.msra.mxu0 0
    %254 = vmatprep.subr.bf16.mxu0 0
    %255 = vmatpush1.bf16.msra.mxu0 0
    %256 = vmatprep.subr.bf16.mxu0 0
    %257 = vmatpush1.bf16.msra.mxu0 0
    %258 = vmatprep.subr.bf16.mxu0 0
    %259 = vmatpush1.bf16.msra.mxu0 0
    %260 = vmatprep.subr.bf16.mxu0 0
    %261 = vmatpush1.bf16.msra.mxu0 0
    %262 = vmatprep.subr.bf16.mxu0 0
    %263 = vmatpush1.bf16.msra.mxu0 0
    %264 = vmatprep.mubr.bf16.mxu0 0
    %265 = vmatmul.mubr.bf16.gmra.mrb[0].mxu0 %v230
    %v266 = vpop.f32.mrb[0].mxu0
    %v267 = vadd.f32 %v212, %v266
    %v268 = vpop.f32.mrb[0].mxu0
    %v269 = vpop.f32.mrb[0].mxu0
    %v270 = vpop.f32.mrb[0].mxu0
    %271 = vdwg.mxu0
    %v272 = vunpack.c.l.bf16 %v161
    %v273 = vlaneseq
    %v274 = vshrl.u32 %v273, 7
    %v275 = vsub.s32 0, %v274
    %v276 = vrot.slane %v272, %v275
    %v277 = vadd.f32 %v267, %v276
    %v278 = vtanh.pop %v277
    %s279 = scalar_lea.vmem [#allocation2], 8
    %280 = vst [vmem:[%s279] sm:$0xff] %v278
    // Predicated region
    $region10: #{tpu_custom_call.1} parent=1 // pred_check
      _
    $region11: #{tpu_custom_call.1} parent=1 // pred_check_branch
      %282 = sbr.rel (0) target = $region13
    $region12: #{tpu_custom_call.1} parent=1 // pred_region
      %s284 = ssub.s32 256, 256
      %285 = vsyncadd [#allocation3], %s284
      %s286 = sshll.u32 [#allocation2], 4
      %s287 = int_to_ptr.vmem [resolvable:$true] %s286
      %292 = dma.vmem_to_hbm [thread:$0]  %s287, 256, %s2, [#allocation3], 128, 128, 8
    $region13: #{tpu_custom_call.1} parent=1 // pred_fallthru
      _
    // Predicated region
    $region14: #{tpu_custom_call.1} parent=1 // pred_check
      _
    $region15: #{tpu_custom_call.1} parent=1 // pred_check_branch
      %294 = sbr.rel (0) target = $region17
    $region16: #{tpu_custom_call.1} parent=1 // pred_region
      %295 = dma.done [#allocation3], 256
    $region17: #{tpu_custom_call.1} parent=1 // pred_fallthru
      _
    %296 = vsyncpa [#allocation3], 1

</llo_original>
